<compile_context>
chip_gen: v7x
topology: tpu7x:2x2x1
jax: 0.10.0
libtpu: 0.0.40
codegen_flags: <defaults>
</compile_context>

<pallas_src>
import functools

import jax
import jax.numpy as jnp
from jax.experimental import pallas as pl
from jax.experimental.pallas import tpu as pltpu

IN_DIM = 100
HID_DIM = 50
OUT_DIM = 2
HID_PAD = 128            # lane-dense hidden width (zero padded; semantics preserved)
DEFAULT_TILE_B = 8192    # ~20 MiB working set; see vmem_limit_bytes below
VMEM_LIMIT_BYTES = 48 << 20  # safe on v7x (64 MiB phys) and raises v5e's 16 MiB default


def _round_up(n, m):
    return ((n + m - 1) // m) * m


def dna_encoder_kernel(x_ref, w1_ref, b1_ref, w2t_ref, b2_ref, o_ref):
    # fc1 on the MXU: (TB, 100) @ (100, 128) + (1, 128) -> ReLU.
    h = jnp.dot(x_ref[...], w1_ref[...], preferred_element_type=jnp.float32)
    h = jnp.maximum(h + b1_ref[...], 0.0)

    # fc2 off the MXU (N=2 is too narrow to be worth MXU pushes on v5e/v7x):
    # per output column, a VPU broadcast-multiply followed by an XLU lane reduction.
    w2t = w2t_ref[...]                                            # (2, 128)
    y0 = jnp.sum(h * w2t[0:1, :], axis=-1, keepdims=True)         # (TB, 1)
    y1 = jnp.sum(h * w2t[1:2, :], axis=-1, keepdims=True)         # (TB, 1)
    y = jnp.concatenate([y0, y1], axis=-1) + b2_ref[...]          # (TB, 2)

    # Exact sigmoid (exp goes to the EUP slot); keeps 1e-5 parity with the reference.
    o_ref[...] = 1.0 / (1.0 + jnp.exp(-y))


def prepare_params(w1, b1, w2, b2):
    """Pad/transpose parameters once (outside the per-call hot path).

    w1: (100, 50), b1: (1, 50), w2: (50, 2), b2: (1, 2)  ->
    w1_p: (100, 128), b1_p: (1, 128), w2t_p: (2, 128), b2: (1, 2)
    """
    w1_p = jnp.zeros((IN_DIM, HID_PAD), jnp.float32).at[:, :HID_DIM].set(w1)
    b1_p = jnp.zeros((1, HID_PAD), jnp.float32).at[:, :HID_DIM].set(b1)
    w2t_p = jnp.zeros((OUT_DIM, HID_PAD), jnp.float32).at[:, :HID_DIM].set(w2.T)
    return w1_p, b1_p, w2t_p, b2


@functools.partial(jax.jit, static_argnames=("tile_b",))
def dna_encoder_forward(x, w1_p, b1_p, w2t_p, b2, *, tile_b=DEFAULT_TILE_B):
    B = x.shape[0]

    # Tile selection: multiple of 8, capped by tile_b, and capped near B/2 so the
    # grid has >= 2 blocks whenever the batch allows it (v7x megacore utilization).
    tb = max(8, min(tile_b, _round_up(pl.cdiv(B, 2), 8)))
    grid = (pl.cdiv(B, tb),)   # ragged last block; OOB rows are never written back

    cost = pl.CostEstimate(
        flops=2 * B * (IN_DIM * HID_DIM + HID_DIM * OUT_DIM),
        transcendentals=B * OUT_DIM,
        bytes_accessed=4 * (B * IN_DIM + IN_DIM * HID_PAD + HID_PAD
                            + OUT_DIM * HID_PAD + OUT_DIM + B * OUT_DIM),
    )

    return pl.pallas_call(
        dna_encoder_kernel,
        out_shape=jax.ShapeDtypeStruct((B, OUT_DIM), jnp.float32),
        grid_spec=pl.GridSpec(
            grid=grid,
            in_specs=[
                pl.BlockSpec((tb, IN_DIM), lambda i: (i, 0)),        # x: streamed
                pl.BlockSpec((IN_DIM, HID_PAD), lambda i: (0, 0)),   # weights: resident
                pl.BlockSpec((1, HID_PAD), lambda i: (0, 0)),
                pl.BlockSpec((OUT_DIM, HID_PAD), lambda i: (0, 0)),
                pl.BlockSpec((1, OUT_DIM), lambda i: (0, 0)),
            ],
            out_specs=pl.BlockSpec((tb, OUT_DIM), lambda i: (i, 0)),
        ),
        compiler_params=pltpu.CompilerParams(
            # Batch tiles are independent -> shardable across v7x's two TensorCores.
            dimension_semantics=("parallel",),
            vmem_limit_bytes=VMEM_LIMIT_BYTES,
        ),
        cost_estimate=cost,
    )(x, w1_p, b1_p, w2t_p, b2)


def init_params(key):
    # Mirror PyTorch nn.Linear default init: U(-1/sqrt(fan_in), 1/sqrt(fan_in)),
    # with weights stored transposed ((in, out)) so the kernel computes y = x @ W + b.
    k1, k2, k3, k4 = jax.random.split(key, 4)
    bound1 = 1.0 / jnp.sqrt(jnp.float32(IN_DIM))
    bound2 = 1.0 / jnp.sqrt(jnp.float32(HID_DIM))
    w1 = jax.random.uniform(k1, (IN_DIM, HID_DIM), jnp.float32, -bound1, bound1)
    b1 = jax.random.uniform(k2, (1, HID_DIM), jnp.float32, -bound1, bound1)
    w2 = jax.random.uniform(k3, (HID_DIM, OUT_DIM), jnp.float32, -bound2, bound2)
    b2 = jax.random.uniform(k4, (1, OUT_DIM), jnp.float32, -bound2, bound2)
    return w1, b1, w2, b2


def reference_forward(x, w1, b1, w2, b2):
    h = jnp.maximum(x @ w1 + b1, 0.0)
    return jax.nn.sigmoid(h @ w2 + b2)


if __name__ == "__main__":
    key = jax.random.PRNGKey(0)
    k_x, k_p = jax.random.split(key)

    # Small shapes; B deliberately not a multiple of the tile so the ragged
    # last-block path and the multi-tile ("parallel") grid are both exercised.
    B = 20
    x = jax.random.normal(k_x, (B, IN_DIM), jnp.float32)
    w1, b1, w2, b2 = init_params(k_p)
    w1_p, b1_p, w2t_p, b2_p = prepare_params(w1, b1, w2, b2)

    out = dna_encoder_forward(x, w1_p, b1_p, w2t_p, b2_p, tile_b=8)
    out = jax.block_until_ready(out)

    ref = reference_forward(x, w1, b1, w2, b2)
    assert out.shape == (B, OUT_DIM)
    assert jnp.allclose(out, ref, atol=1e-5, rtol=1e-5)

    print("KERNEL_OK")
</pallas_src>

<mosaic_0001>
module attributes {stable_mosaic.version = 11 : i64} {
  func.func @dna_encoder_kernel(%arg0: i32, %arg1: memref<8x100xf32, #tpu.memory_space<vmem>>, %arg2: memref<100x128xf32, #tpu.memory_space<vmem>>, %arg3: memref<1x128xf32, #tpu.memory_space<vmem>>, %arg4: memref<2x128xf32, #tpu.memory_space<vmem>>, %arg5: memref<1x2xf32, #tpu.memory_space<vmem>>, %arg6: memref<8x2xf32, #tpu.memory_space<vmem>>) attributes {dimension_semantics = [#tpu.dimension_semantics<parallel>], iteration_bounds = array<i64: 3>, scalar_prefetch = 0 : i64, scratch_operands = 0 : i64, tpu.core_type = #tpu.core_type<tc>, window_params = [{transform_indices = @transform_0, window_bounds = array<i64: 8, 100>}, {pipeline_mode = #tpu.pipeline_mode<synchronous>, transform_indices = @transform_1, window_bounds = array<i64: 100, 128>}, {pipeline_mode = #tpu.pipeline_mode<synchronous>, transform_indices = @transform_2, window_bounds = array<i64: 1, 128>}, {pipeline_mode = #tpu.pipeline_mode<synchronous>, transform_indices = @transform_3, window_bounds = array<i64: 2, 128>}, {pipeline_mode = #tpu.pipeline_mode<synchronous>, transform_indices = @transform_4, window_bounds = array<i64: 1, 2>}, {transform_indices = @transform_5, window_bounds = array<i64: 8, 2>}]} {
    %c0 = arith.constant 0 : index
    %c0_0 = arith.constant 0 : index
    %0 = vector.load %arg1[%c0, %c0_0] : memref<8x100xf32, #tpu.memory_space<vmem>>, vector<8x100xf32>
    %c0_1 = arith.constant 0 : index
    %c0_2 = arith.constant 0 : index
    %1 = vector.load %arg2[%c0_1, %c0_2] : memref<100x128xf32, #tpu.memory_space<vmem>>, vector<100x128xf32>
    %cst = arith.constant dense<0.000000e+00> : vector<8x128xf32>
    %2 = tpu.matmul %0, %1, %cst {dimension_numbers = #tpu.dot_dimension_numbers<[1], [0], [0], [1], [0, 0, 1, 1], [], []>} : vector<8x100xf32>, vector<100x128xf32>, vector<8x128xf32> -> vector<8x128xf32>
    %c0_3 = arith.constant 0 : index
    %c0_4 = arith.constant 0 : index
    %3 = vector.load %arg3[%c0_3, %c0_4] : memref<1x128xf32, #tpu.memory_space<vmem>>, vector<1x128xf32>
    %4 = vector.broadcast %3 : vector<1x128xf32> to vector<8x128xf32>
    %5 = arith.addf %2, %4 : vector<8x128xf32>
    %cst_5 = arith.constant 0.000000e+00 : f32
    %6 = vector.broadcast %cst_5 : f32 to vector<8x128xf32>
    %7 = arith.maximumf %5, %6 : vector<8x128xf32>
    %c0_6 = arith.constant 0 : index
    %c0_7 = arith.constant 0 : index
    %8 = vector.load %arg4[%c0_6, %c0_7] : memref<2x128xf32, #tpu.memory_space<vmem>>, vector<2x128xf32>
    %9 = vector.extract_strided_slice %8 {offsets = [0, 0], sizes = [1, 128], strides = [1, 1]} : vector<2x128xf32> to vector<1x128xf32>
    %10 = vector.broadcast %9 : vector<1x128xf32> to vector<8x128xf32>
    %11 = arith.mulf %7, %10 : vector<8x128xf32>
    %cst_8 = arith.constant dense<0.000000e+00> : vector<8xf32>
    %12 = vector.multi_reduction <add>, %11, %cst_8 [1] : vector<8x128xf32> to vector<8xf32>
    %13 = vector.shape_cast %12 : vector<8xf32> to vector<8x1xf32>
    %14 = vector.extract_strided_slice %8 {offsets = [1, 0], sizes = [1, 128], strides = [1, 1]} : vector<2x128xf32> to vector<1x128xf32>
    %15 = vector.broadcast %14 : vector<1x128xf32> to vector<8x128xf32>
    %16 = arith.mulf %7, %15 : vector<8x128xf32>
    %cst_9 = arith.constant dense<0.000000e+00> : vector<8xf32>
    %17 = vector.multi_reduction <add>, %16, %cst_9 [1] : vector<8x128xf32> to vector<8xf32>
    %18 = vector.shape_cast %17 : vector<8xf32> to vector<8x1xf32>
    %19 = tpu.concatenate %13, %18 in 1 : vector<8x1xf32>, vector<8x1xf32> -> vector<8x2xf32>
    %c0_10 = arith.constant 0 : index
    %c0_11 = arith.constant 0 : index
    %20 = vector.load %arg5[%c0_10, %c0_11] : memref<1x2xf32, #tpu.memory_space<vmem>>, vector<1x2xf32>
    %21 = vector.broadcast %20 : vector<1x2xf32> to vector<8x2xf32>
    %22 = arith.addf %19, %21 : vector<8x2xf32>
    %cst_12 = arith.constant 0.000000e+00 : f32
    %23 = vector.broadcast %cst_12 : f32 to vector<8x2xf32>
    %24 = arith.subf %23, %22 : vector<8x2xf32>
    %25 = math.exp %24 : vector<8x2xf32>
    %cst_13 = arith.constant 1.000000e+00 : f32
    %26 = vector.broadcast %cst_13 : f32 to vector<8x2xf32>
    %27 = arith.addf %26, %25 : vector<8x2xf32>
    %cst_14 = arith.constant 1.000000e+00 : f32
    %28 = vector.broadcast %cst_14 : f32 to vector<8x2xf32>
    %29 = arith.divf %28, %27 : vector<8x2xf32>
    %c0_15 = arith.constant 0 : index
    %c0_16 = arith.constant 0 : index
    %30 = vector.load %arg6[%c0_15, %c0_16] : memref<8x2xf32, #tpu.memory_space<vmem>>, vector<8x2xf32>
    tpu.vector_store %arg6[%c0_15, %c0_16], %29 {strides = array<i32>} : memref<8x2xf32, #tpu.memory_space<vmem>>, vector<8x2xf32>,
    return
  }
  func.func @transform_0(%arg0: i32) -> (i32, i32) {
    %c0_i32 = arith.constant 0 : i32
    %c0_i32_0 = arith.constant 0 : i32
    return %arg0, %c0_i32 : i32, i32
  }
  func.func @transform_1(%arg0: i32) -> (i32, i32) {
    %c0_i32 = arith.constant 0 : i32
    %c0_i32_0 = arith.constant 0 : i32
    %c0_i32_1 = arith.constant 0 : i32
    return %c0_i32, %c0_i32_0 : i32, i32
  }
  func.func @transform_2(%arg0: i32) -> (i32, i32) {
    %c0_i32 = arith.constant 0 : i32
    %c0_i32_0 = arith.constant 0 : i32
    %c0_i32_1 = arith.constant 0 : i32
    return %c0_i32, %c0_i32_0 : i32, i32
  }
  func.func @transform_3(%arg0: i32) -> (i32, i32) {
    %c0_i32 = arith.constant 0 : i32
    %c0_i32_0 = arith.constant 0 : i32
    %c0_i32_1 = arith.constant 0 : i32
    return %c0_i32, %c0_i32_0 : i32, i32
  }
  func.func @transform_4(%arg0: i32) -> (i32, i32) {
    %c0_i32 = arith.constant 0 : i32
    %c0_i32_0 = arith.constant 0 : i32
    %c0_i32_1 = arith.constant 0 : i32
    return %c0_i32, %c0_i32_0 : i32, i32
  }
  func.func @transform_5(%arg0: i32) -> (i32, i32) {
    %c0_i32 = arith.constant 0 : i32
    %c0_i32_0 = arith.constant 0 : i32
    return %arg0, %c0_i32 : i32, i32
  }
}

</mosaic_0001>

<llo_original>
// kernel: dna_encoder_forward.1
$region0: #{dna_encoder_forward.1}
  #allocation0 [shape = 'u32[]', space=smem, size = 0x4, offset = 0x4, fixed_abs, tag = 'smem constant byte address 0x4 - core index']
  #allocation1 [shape = 'u32[144,128]{1,0:T(1,128)}', space=vmem, size = 0x12000, scoped, tag = 'internal scratch']
  %s0 = inlined_call_operand.hbm [shape: f32[20,100], index: 0, kind: input, shape index: {}]
  %s1 = inlined_call_operand.hbm [shape: f32[100,128], index: 1, kind: input, shape index: {}]
  %s2 = inlined_call_operand.vmem [shape: f32[1,128], index: 2, kind: input, shape index: {}]
  %s3 = inlined_call_operand.vmem [shape: f32[2,128], index: 3, kind: input, shape index: {}]
  %s4 = inlined_call_operand.vmem [shape: f32[1,2], index: 4, kind: input, shape index: {}]
  %s5 = inlined_call_operand.vmem [shape: f32[20,2], index: 5, kind: output, shape index: {}]
  %s6 = sld [smem:[#allocation0]]
  $region61: #{dna_encoder_forward.1} parent=0
    _
  %s8 = ssub.s32 1, %s6
  %s9 = scalar_select 0, %s8, %s6
  $region1: #{dna_encoder_forward.1} parent=0
    #allocation2 [shape = 'u8[8192]{0}', space=vmem, size = 0x2000, scoped, tag = 'input window, operand 0']
    #allocation3 [shape = 's32[2]{0}', space=sflag, size = 0x8, scoped, tag = 'scoped memory for dna_encoder_forward.1']
    #allocation4 [shape = 'u8[53248]{0}', space=vmem, size = 0xd000, scoped, tag = 'input window, operand 1, single buffered']
    #allocation5 [shape = 's32[1]{0}', space=sflag, size = 0x4, scoped, tag = 'scoped memory for dna_encoder_forward.1']
    %10 = vsyncpa [#allocation3], 0
    %s11 = scalar_lea.sflag [#allocation3], 1
    %12 = vsyncpa %s11, 0
    %13 = vsyncpa [#allocation5], 0
    loop: start=0, step=1, limit=5
    $region2: #{dna_encoder_forward.1} parent=1 // loop_pre_header
      _
    $region3: #{dna_encoder_forward.1} parent=1 // loop_header
      %s15 = sphi 0, %s19
      %p16 = scmp.ge.s32.totalorder %s15, 5
      %s25 = sphi 0, %s27
      %s28 = sphi 0, %s25
      %s29 = sphi 0, %s28
      %s45 = sphi 0, %s29
      %s49 = sphi 0, %s49
      %s51 = sphi 0, %s49
      %s52 = sphi 0, %s51
      %s66 = sphi 0, %s52
      %s70 = sphi 0, %s70
      %s72 = sphi 0, %s70
      %s73 = sphi 0, %s72
      %s87 = sphi 0, %s73
      %s91 = sphi 0, %s91
      %s93 = sphi 0, %s91
      %s94 = sphi 0, %s93
      %s108 = sphi 0, %s94
      %s112 = sphi 0, %s112
      %s114 = sphi 0, %s112
      %s115 = sphi 0, %s114
      %s129 = sphi 0, %s115
      %s135 = sphi 0, %s137
      %s138 = sphi 0, %s135
      %s139 = sphi 0, %s138
      %s155 = sphi 0, %s139
    $region4: #{dna_encoder_forward.1} parent=1 // loop_header_branch
      %18 = sbr.rel (%p16) target = $region8
    $region5: #{dna_encoder_forward.1} parent=1 // loop_body
      %s20 = ssub.s32 %s15, 1
      %s21 = ssub.s32 %s15, 2
      %s22 = sadd.s32 %s15, 1
      %s23 = ssub.s32 %s15, %s22
      %p24 = scmp.eq.s32.totalorder %s23, 0
      %s26 = sadd.s32 %s25, 1
      %s27 = scalar_select %p24, %s25, %s26
      %p30 = pneg %p24
      %p31 = scmp.eq.s32.totalorder %s15, 2
      %p32 = por %p30, %p31
      %p33 = scmp.ne.s32.totalorder %s25, %s28
      %p34 = scmp.eq.s32.totalorder %s15, 0
      %p35 = por %p33, %p34
      %p36 = scmp.ne.s32.totalorder %s25, %s28
      %p37 = scmp.eq.s32.totalorder %s20, 2
      %p38 = por %p36, %p37
      %p39 = scmp.ne.s32.totalorder %s28, %s29
      %p40 = scmp.eq.s32.totalorder %s20, 0
      %p41 = por %p39, %p40
      %p42 = scmp.ne.s32.totalorder %s28, %s29
      %p43 = scmp.eq.s32.totalorder %s21, 2
      %p44 = por %p42, %p43
      %p46 = scmp.ne.s32.totalorder %s29, %s45
      %p47 = scmp.eq.s32.totalorder %s21, 0
      %p48 = por %p46, %p47
      %s50 = sadd.s32 %s49, 1
      %p53 = scmp.eq.s32.totalorder %s15, 2
      %p54 = scmp.ne.s32.totalorder %s49, %s51
      %p55 = scmp.eq.s32.totalorder %s15, 0
      %p56 = por %p54, %p55
      %p57 = scmp.ne.s32.totalorder %s49, %s51
      %p58 = scmp.eq.s32.totalorder %s20, 2
      %p59 = por %p57, %p58
      %p60 = scmp.ne.s32.totalorder %s51, %s52
      %p61 = scmp.eq.s32.totalorder %s20, 0
      %p62 = por %p60, %p61
      %p63 = scmp.ne.s32.totalorder %s51, %s52
      %p64 = scmp.eq.s32.totalorder %s21, 2
      %p65 = por %p63, %p64
      %p67 = scmp.ne.s32.totalorder %s52, %s66
      %p68 = scmp.eq.s32.totalorder %s21, 0
      %p69 = por %p67, %p68
      %s71 = sadd.s32 %s70, 1
      %p74 = scmp.eq.s32.totalorder %s15, 2
      %p75 = scmp.ne.s32.totalorder %s70, %s72
      %p76 = scmp.eq.s32.totalorder %s15, 0
      %p77 = por %p75, %p76
      %p78 = scmp.ne.s32.totalorder %s70, %s72
      %p79 = scmp.eq.s32.totalorder %s20, 2
      %p80 = por %p78, %p79
      %p81 = scmp.ne.s32.totalorder %s72, %s73
      %p82 = scmp.eq.s32.totalorder %s20, 0
      %p83 = por %p81, %p82
      %p84 = scmp.ne.s32.totalorder %s72, %s73
      %p85 = scmp.eq.s32.totalorder %s21, 2
      %p86 = por %p84, %p85
      %p88 = scmp.ne.s32.totalorder %s73, %s87
      %p89 = scmp.eq.s32.totalorder %s21, 0
      %p90 = por %p88, %p89
      %s92 = sadd.s32 %s91, 1
      %p95 = scmp.eq.s32.totalorder %s15, 2
      %p96 = scmp.ne.s32.totalorder %s91, %s93
      %p97 = scmp.eq.s32.totalorder %s15, 0
      %p98 = por %p96, %p97
      %p99 = scmp.ne.s32.totalorder %s91, %s93
      %p100 = scmp.eq.s32.totalorder %s20, 2
      %p101 = por %p99, %p100
      %p102 = scmp.ne.s32.totalorder %s93, %s94
      %p103 = scmp.eq.s32.totalorder %s20, 0
      %p104 = por %p102, %p103
      %p105 = scmp.ne.s32.totalorder %s93, %s94
      %p106 = scmp.eq.s32.totalorder %s21, 2
      %p107 = por %p105, %p106
      %p109 = scmp.ne.s32.totalorder %s94, %s108
      %p110 = scmp.eq.s32.totalorder %s21, 0
      %p111 = por %p109, %p110
      %s113 = sadd.s32 %s112, 1
      %p116 = scmp.eq.s32.totalorder %s15, 2
      %p117 = scmp.ne.s32.totalorder %s112, %s114
      %p118 = scmp.eq.s32.totalorder %s15, 0
      %p119 = por %p117, %p118
      %p120 = scmp.ne.s32.totalorder %s112, %s114
      %p121 = scmp.eq.s32.totalorder %s20, 2
      %p122 = por %p120, %p121
      %p123 = scmp.ne.s32.totalorder %s114, %s115
      %p124 = scmp.eq.s32.totalorder %s20, 0
      %p125 = por %p123, %p124
      %p126 = scmp.ne.s32.totalorder %s114, %s115
      %p127 = scmp.eq.s32.totalorder %s21, 2
      %p128 = por %p126, %p127
      %p130 = scmp.ne.s32.totalorder %s115, %s129
      %p131 = scmp.eq.s32.totalorder %s21, 0
      %p132 = por %p130, %p131
      %s133 = ssub.s32 %s15, %s22
      %p134 = scmp.eq.s32.totalorder %s133, 0
      %s136 = sadd.s32 %s135, 1
      %s137 = scalar_select %p134, %s135, %s136
      %p140 = pneg %p134
      %p141 = scmp.eq.s32.totalorder %s15, 2
      %p142 = por %p140, %p141
      %p143 = scmp.ne.s32.totalorder %s135, %s138
      %p144 = scmp.eq.s32.totalorder %s15, 0
      %p145 = por %p143, %p144
      %p146 = scmp.ne.s32.totalorder %s135, %s138
      %p147 = scmp.eq.s32.totalorder %s20, 2
      %p148 = por %p146, %p147
      %p149 = scmp.ne.s32.totalorder %s138, %s139
      %p150 = scmp.eq.s32.totalorder %s20, 0
      %p151 = por %p149, %p150
      %p152 = scmp.ne.s32.totalorder %s138, %s139
      %p153 = scmp.eq.s32.totalorder %s21, 2
      %p154 = por %p152, %p153
      %p156 = scmp.ne.s32.totalorder %s139, %s155
      %p157 = scmp.eq.s32.totalorder %s21, 0
      %p158 = por %p156, %p157
      %p159 = scmp.le.s32.totalorder 1, %s15
      %p160 = scmp.lt.s32.totalorder %s15, 4
      %p161 = pnand %p159, %p160
      %p162 = pneg %p161
      // Predicated region
      $region9: #{dna_encoder_forward.1} parent=5 // pred_check
        _
      $region10: #{dna_encoder_forward.1} parent=5 // pred_check_branch
        %164 = sbr.rel (%p161) target = $region12
      $region11: #{dna_encoder_forward.1} parent=5 // pred_region
        %s165 = ssub.s32 %s15, 1
        // Predicated region
        $region13: #{dna_encoder_forward.1} parent=11 // pred_check
          %p166 = pneg %p62
        $region14: #{dna_encoder_forward.1} parent=11 // pred_check_branch
          %168 = sbr.rel (%p166) target = $region16
        $region15: #{dna_encoder_forward.1} parent=11 // pred_region
          %s170 = ssub.s32 1664, 1664
          %171 = vsyncadd [#allocation5], %s170
          %s172 = sshll.u32 [#allocation4], 4
          %s173 = int_to_ptr.vmem [resolvable:$true] %s172
          %178 = dma.hbm_to_vmem [thread:$0]  %s1, 1664, %s173, [#allocation5], 128, 128, 8
        $region16: #{dna_encoder_forward.1} parent=11 // pred_fallthru
          _
        // Predicated region
        $region17: #{dna_encoder_forward.1} parent=11 // pred_check
          %p179 = pneg %p83
        $region18: #{dna_encoder_forward.1} parent=11 // pred_check_branch
          %181 = sbr.rel (%p179) target = $region20
        $region19: #{dna_encoder_forward.1} parent=11 // pred_region
          _
        $region20: #{dna_encoder_forward.1} parent=11 // pred_fallthru
          _
        // Predicated region
        $region21: #{dna_encoder_forward.1} parent=11 // pred_check
          %p182 = pneg %p104
        $region22: #{dna_encoder_forward.1} parent=11 // pred_check_branch
          %184 = sbr.rel (%p182) target = $region24
        $region23: #{dna_encoder_forward.1} parent=11 // pred_region
          _
        $region24: #{dna_encoder_forward.1} parent=11 // pred_fallthru
          _
        // Predicated region
        $region25: #{dna_encoder_forward.1} parent=11 // pred_check
          %p185 = pneg %p125
        $region26: #{dna_encoder_forward.1} parent=11 // pred_check_branch
          %187 = sbr.rel (%p185) target = $region28
        $region27: #{dna_encoder_forward.1} parent=11 // pred_region
          _
        $region28: #{dna_encoder_forward.1} parent=11 // pred_fallthru
          _
      $region12: #{dna_encoder_forward.1} parent=5 // pred_fallthru
        _
      %p188 = scmp.lt.s32.totalorder %s15, 3
      // Predicated region
      $region29: #{dna_encoder_forward.1} parent=5 // pred_check
        %p189 = pneg %p188
      $region30: #{dna_encoder_forward.1} parent=5 // pred_check_branch
        %191 = sbr.rel (%p189) target = $region32
      $region31: #{dna_encoder_forward.1} parent=5 // pred_region
        // Predicated region
        $region33: #{dna_encoder_forward.1} parent=31 // pred_check
          %p192 = pneg %p35
        $region34: #{dna_encoder_forward.1} parent=31 // pred_check_branch
          %194 = sbr.rel (%p192) target = $region36
        $region35: #{dna_encoder_forward.1} parent=31 // pred_region
          %s195 = sand.u32 %s25, 1
          %s196 = scalar_lea.sflag [#allocation3], %s195
          %s197 = sand.u32 %s25, 1
          %s198 = smul.addr %s197, 8
          %s199 = scalar_lea.vmem [#allocation2], %s198
          %s201 = ssub.s32 128, 128
          %202 = vsyncadd %s196, %s201
          %s203 = smul.addr %s15, 128
          %s204 = scalar_lea.hbm %s0, %s203
          %s206 = sshll.u32 %s199, 4
          %s207 = int_to_ptr.vmem [resolvable:$true] %s206
          %209 = dma.hbm_to_vmem [thread:$0]  %s204, 128, %s207, %s196
        $region36: #{dna_encoder_forward.1} parent=31 // pred_fallthru
          _
      $region32: #{dna_encoder_forward.1} parent=5 // pred_fallthru
        _
      %p210 = scmp.le.s32.totalorder 1, %s15
      %p211 = scmp.lt.s32.totalorder %s15, 4
      %p212 = pnand %p210, %p211
      %p213 = pneg %p212
      // Predicated region
      $region37: #{dna_encoder_forward.1} parent=5 // pred_check
        _
      $region38: #{dna_encoder_forward.1} parent=5 // pred_check_branch
        %215 = sbr.rel (%p212) target = $region40
      $region39: #{dna_encoder_forward.1} parent=5 // pred_region
        %s216 = ssub.s32 %s15, 1
        %s217 = sand.u32 %s28, 1
        %s218 = scalar_lea.sflag [#allocation3], %s217
        %s219 = sand.u32 %s28, 1
        %s220 = smul.addr %s219, 8
        %s221 = scalar_lea.vmem [#allocation2], %s220
        // Predicated region
        $region41: #{dna_encoder_forward.1} parent=39 // pred_check
          %p222 = pneg %p41
        $region42: #{dna_encoder_forward.1} parent=39 // pred_check_branch
          %224 = sbr.rel (%p222) target = $region44
        $region43: #{dna_encoder_forward.1} parent=39 // pred_region
          %225 = dma.done %s218, 128
        $region44: #{dna_encoder_forward.1} parent=39 // pred_fallthru
          _
        // Predicated region
        $region45: #{dna_encoder_forward.1} parent=39 // pred_check
          %p226 = pneg %p62
        $region46: #{dna_encoder_forward.1} parent=39 // pred_check_branch
          %228 = sbr.rel (%p226) target = $region48
        $region47: #{dna_encoder_forward.1} parent=39 // pred_region
          %229 = dma.done [#allocation5], 1664
        $region48: #{dna_encoder_forward.1} parent=39 // pred_fallthru
          _
        %s230 = sand.u32 %s28, 1
        %s231 = scalar_lea.sflag [#allocation3], %s230
        %s232 = sand.u32 %s28, 1
        %s233 = smul.addr %s232, 8
        %s234 = scalar_lea.vmem [#allocation2], %s233
        %p235 = pneg %p41
        %p236 = pneg %p38
        %p237 = pneg %p62
        %p238 = pneg %p59
        %p239 = pneg %p83
        %p240 = pneg %p80
        %p241 = pneg %p104
        %p242 = pneg %p101
        %p243 = pneg %p125
        %p244 = pneg %p122
        %p245 = pneg %p151
        %p246 = pneg %p148
        %p247 = scmp.lt.s32.totalorder %s20, 2
        %s248 = scalar_select %p247, %s20, 2
        %s249 = smul.addr %s248, 8
        %s250 = scalar_lea.vmem %s5, %s249
        %p251 = scmp.lt.s32.totalorder %s20, 2
        %s252 = scalar_select %p251, %s20, 2
        %s253 = smul.addr %s252, 8
        %s254 = scalar_lea.vmem %s5, %s253
        %v255 = vld [vmem:[%s221] sm:$0xff]
        %v256 = vld [vmem:[#allocation4] sm:$0xff]
        %v257 = vld [vmem:[#allocation4 + $0x8] sm:$0xff]
        %v258 = vld [vmem:[#allocation4 + $0x10] sm:$0xff]
        %v259 = vld [vmem:[#allocation4 + $0x18] sm:$0xff]
        %v260 = vld [vmem:[#allocation4 + $0x20] sm:$0xff]
        %v261 = vld [vmem:[#allocation4 + $0x28] sm:$0xff]
        %v262 = vld [vmem:[#allocation4 + $0x30] sm:$0xff]
        %v263 = vld [vmem:[#allocation4 + $0x38] sm:$0xff]
        %v264 = vld [vmem:[#allocation4 + $0x40] sm:$0xff]
        %v265 = vld [vmem:[#allocation4 + $0x48] sm:$0xff]
        %v266 = vld [vmem:[#allocation4 + $0x50] sm:$0xff]
        %v267 = vld [vmem:[#allocation4 + $0x58] sm:$0xff]
        %v268 = vld [vmem:[#allocation4 + $0x60] sm:$0xf]
        %v269 = vld [vmem:[%s2] sm:$0x1]
        %v271 = vlaneseq
        %v272 = vshrl.u32 %v271, 7
        %v273 = vsub.s32 0, %v272
        %v274 = vrot.slane %v269, %v273
        %vm276 = vcmask 818176
        %v278 = vsel %vm276, %v255, 0
        %vm280 = vcmask 1043456
        %v282 = vsel %vm280, %v268, 0
        %284 = vmatprep.subr.mxu0 0.0
        %285 = vmatpush1.msra.mxu0 %v256
        %286 = vmatprep.subr.mxu0 0.0
        %287 = vmatpush1.msra.mxu0 %v257
        %288 = vmatprep.subr.mxu0 0.0
        %289 = vmatpush1.msra.mxu0 %v258
        %290 = vmatprep.subr.mxu0 0.0
        %291 = vmatpush1.msra.mxu0 %v259
        %292 = vmatprep.subr.mxu0 0.0
        %293 = vmatpush1.msra.mxu0 %v260
        %294 = vmatprep.subr.mxu0 0.0
        %295 = vmatpush1.msra.mxu0 %v261
        %296 = vmatprep.subr.mxu0 0.0
        %297 = vmatpush1.msra.mxu0 %v262
        %298 = vmatprep.subr.mxu0 0.0
        %299 = vmatpush1.msra.mxu0 %v263
        %300 = vmatprep.subr.mxu0 0.0
        %301 = vmatpush1.msra.mxu0 %v264
        %302 = vmatprep.subr.mxu0 0.0
        %303 = vmatpush1.msra.mxu0 %v265
        %304 = vmatprep.subr.mxu0 0.0
        %305 = vmatpush1.msra.mxu0 %v266
        %306 = vmatprep.subr.mxu0 0.0
        %307 = vmatpush1.msra.mxu0 %v267
        %308 = vmatprep.subr.mxu0 0.0
        %309 = vmatpush1.msra.mxu0 %v282
        %310 = vmatprep.subr.mxu0 0.0
        %311 = vmatpush1.msra.mxu0 0.0
        %312 = vmatprep.subr.mxu0 0.0
        %313 = vmatpush1.msra.mxu0 0.0
        %314 = vmatprep.subr.mxu0 0.0
        %315 = vmatpush1.msra.mxu0 0.0
        %316 = vmatprep.subr.mxu0 0.0
        %317 = vmatpush1.msra.mxu0 0.0
        %318 = vmatprep.subr.mxu0 0.0
        %319 = vmatpush1.msra.mxu0 0.0
        %320 = vmatprep.subr.mxu0 0.0
        %321 = vmatpush1.msra.mxu0 0.0
        %322 = vmatprep.subr.mxu0 0.0
        %323 = vmatpush1.msra.mxu0 0.0
        %324 = vmatprep.subr.mxu0 0.0
        %325 = vmatpush1.msra.mxu0 0.0
        %326 = vmatprep.subr.mxu0 0.0
        %327 = vmatpush1.msra.mxu0 0.0
        %328 = vmatprep.subr.mxu0 0.0
        %329 = vmatpush1.msra.mxu0 0.0
        %330 = vmatprep.subr.mxu0 0.0
        %331 = vmatpush1.msra.mxu0 0.0
        %332 = vmatprep.subr.mxu0 0.0
        %333 = vmatpush1.msra.mxu0 0.0
        %334 = vmatprep.subr.mxu0 0.0
        %335 = vmatpush1.msra.mxu0 0.0
        %336 = vmatprep.subr.mxu0 0.0
        %337 = vmatpush1.msra.mxu0 0.0
        %338 = vmatprep.subr.mxu0 0.0
        %339 = vmatpush1.msra.mxu0 0.0
        %340 = vmatprep.subr.mxu0 0.0
        %341 = vmatpush1.msra.mxu0 0.0
        %342 = vmatprep.subr.mxu0 0.0
        %343 = vmatpush1.msra.mxu0 0.0
        %344 = vmatprep.subr.mxu0 0.0
        %345 = vmatpush1.msra.mxu0 0.0
        %346 = vmatprep.subr.mxu0 0.0
        %347 = vmatpush1.msra.mxu0 0.0
        %348 = vmatprep.mubr.f32.mxu0 0.0
        %349 = vmatmul.mubr.f32.gmra.mrb[0].mxu0 %v278
        %v350 = vpop.f32.mrb[0].mxu0
        %v351 = vadd.f32 %v274, %v350
        %v352 = vpop.f32.mrb[0].mxu0
        %353 = vdwg.mxu0
        %v354 = vmax.f32 %v351, 0.0
        %v355 = vld [vmem:[%s3] sm:$0x3]
        %v356 = vlaneseq
        %v357 = vshrl.u32 %v356, 7
        %v358 = vsub.s32 0, %v357
        %v359 = vrot.slane %v355, %v358
        %v360 = vmul.f32 %v354, %v359
        %361 = vadd.xlane.f32.xlu0 %v360
        %v362 = vpop.xlane.xlu0 %361
        %v363 = vlaneseq
        %v364 = vshrl.u32 %v363, 7
        %v365 = vsub.s32 1, %v364
        %v366 = vrot.slane %v355, %v365
        %v367 = vmul.f32 %v354, %v366
        %368 = vadd.xlane.f32.xlu0 %v367
        %v369 = vpop.xlane.xlu0 %368
        %vm370 = vcmask 7168
        %v371 = vsel %vm370, %v362, %v369
        %v372 = vld [vmem:[%s4] sm:$0x1]
        %v374 = vlaneseq
        %v375 = vshrl.u32 %v374, 7
        %v376 = vsub.s32 0, %v375
        %v377 = vrot.slane %v372, %v376
        %v379 = vadd.f32 %v371, %v377
        %v380 = vsub.f32 0.0, %v379
        %v381 = vmul.f32 %v380, 1.442695
        %v382 = vpow.pop %v381
        %v383 = vadd.f32 %v382, 1.0
        %v384 = vrcp.pop %v383
        %v385 = vmul.f32 1.0, %v384
        %vm386 = vcmask 15360
        %387 = vst.msk [vmem:[%s254] sm:$0xff] %vm386, %v385
        %p388 = scmp.lt.s32.totalorder %s20, 2
        %s389 = scalar_select %p388, %s20, 2
        %s390 = smul.addr %s389, 8
        %s391 = scalar_lea.vmem %s5, %s390
        // Predicated region
        $region49: #{dna_encoder_forward.1} parent=39 // pred_check
          %p392 = pneg %p148
        $region50: #{dna_encoder_forward.1} parent=39 // pred_check_branch
          %394 = sbr.rel (%p392) target = $region52
        $region51: #{dna_encoder_forward.1} parent=39 // pred_region
          _
        $region52: #{dna_encoder_forward.1} parent=39 // pred_fallthru
          _
      $region40: #{dna_encoder_forward.1} parent=5 // pred_fallthru
        _
      %p395 = scmp.le.s32.totalorder 2, %s15
      // Predicated region
      $region53: #{dna_encoder_forward.1} parent=5 // pred_check
        %p396 = pneg %p395
      $region54: #{dna_encoder_forward.1} parent=5 // pred_check_branch
        %398 = sbr.rel (%p396) target = $region56
      $region55: #{dna_encoder_forward.1} parent=5 // pred_region
        %s399 = ssub.s32 %s15, 2
        // Predicated region
        $region57: #{dna_encoder_forward.1} parent=55 // pred_check
          %p400 = pneg %p154
        $region58: #{dna_encoder_forward.1} parent=55 // pred_check_branch
          %402 = sbr.rel (%p400) target = $region60
        $region59: #{dna_encoder_forward.1} parent=55 // pred_region
          %p403 = scmp.lt.s32.totalorder %s21, 2
          %s404 = scalar_select %p403, %s21, 2
          %s405 = smul.addr %s404, 8
          %s406 = scalar_lea.vmem %s5, %s405
        $region60: #{dna_encoder_forward.1} parent=55 // pred_fallthru
          _
      $region56: #{dna_encoder_forward.1} parent=5 // pred_fallthru
        _
    $region6: #{dna_encoder_forward.1} parent=1 // loop_footer
      %s19 = sadd.s32 1, %s15
    $region7: #{dna_encoder_forward.1} parent=1 // loop_footer_branch
      %14 = sbr.rel target = $region3
    $region8: #{dna_encoder_forward.1} parent=1 // loop_exit
      _
    %407 = vsyncpa [#allocation3], 1
    %s408 = scalar_lea.sflag [#allocation3], 1
    %409 = vsyncpa %s408, 1
    %410 = vsyncpa [#allocation5], 1

</llo_original>
